<compile_context>
chip_gen: v6e
topology: v6e:2x2x1
jax: 0.10.0
libtpu: 0.0.40
codegen_flags: <defaults>
</compile_context>

<pallas_src>
import jax
import jax.numpy as jnp
from jax.experimental import pallas as pl
from jax.experimental.pallas import tpu as pltpu

H1, H2 = 64, 32          # torch hidden sizes (already sublane-aligned)
CP_ALIGN = 8             # sublane alignment for the (num_classes, B) logits


def _round_up(n, m):
    return (n + m - 1) // m * m


def _mlp_kernel(x_ref, w1_ref, b1_ref, w2_ref, b2_ref, w3_ref, b3_ref, o_ref):
    """Feature-major fused MLP: x_ref (D, TM) -> o_ref (CP, TM)."""
    xT = x_ref[...]                                   # (D, TM) f32
    d = x_ref.shape[0]

    # ---- fc1 + ReLU: h1ᵀ = W1ᵀ @ xᵀ as D VPU outer-product FMAs (D tiny) ----
    h1 = w1_ref[:, 0:1] * xT[0:1, :]                  # (H1,1)*(1,TM) -> (H1,TM)
    for k in range(1, d):                             # static unroll over features
        h1 = h1 + w1_ref[:, k:k + 1] * xT[k:k + 1, :]
    h1 = jnp.maximum(h1 + b1_ref[...], 0.0)           # bias is a column vector

    # ---- fc2 + ReLU: MXU, bf16 operands, f32 accumulation ----
    h2 = jnp.dot(w2_ref[...], h1.astype(jnp.bfloat16),
                 preferred_element_type=jnp.float32)
    h2 = jnp.maximum(h2 + b2_ref[...], 0.0)

    # ---- fc3 (logits, no activation) ----
    out = jnp.dot(w3_ref[...], h2.astype(jnp.bfloat16),
                  preferred_element_type=jnp.float32)
    o_ref[...] = (out + b3_ref[...]).astype(o_ref.dtype)


def color_classifier_forward(x, params, *, block_rows=4096, out_dtype=jnp.float32):
    """x: (B, input_dim) float32.  params: w1,b1,w2,b2,w3,b3 stored as
    (in_features, out_features), i.e. the kernel computes x @ W + b
    (== torch Linear with its (out,in) weight transposed)."""
    w1, b1 = params["w1"], params["b1"]
    w2, b2 = params["w2"], params["b2"]
    w3, b3 = params["w3"], params["b3"]

    B, D = x.shape
    C = w3.shape[1]
    CP = _round_up(C, CP_ALIGN)

    # Feature-major (transposed) weights.  fc1 stays f32 (VPU math); only the
    # MXU operands (w2/w3) are bf16.  Class dim padded to 8 sublanes (exact:
    # zero rows contribute zero logits, sliced away below).
    w1t = w1.T.astype(jnp.float32)                              # (H1, D)
    b1c = b1.reshape(H1, 1).astype(jnp.float32)
    w2t = w2.T.astype(jnp.bfloat16)                             # (H2, H1)
    b2c = b2.reshape(H2, 1).astype(jnp.float32)
    w3t = (jnp.zeros((CP, H2), jnp.float32).at[:C, :].set(w3.T)
           .astype(jnp.bfloat16))                               # (CP, H2)
    b3c = jnp.zeros((CP, 1), jnp.float32).at[:C, 0].set(b3)

    # Batch on the lane axis: pad B to 128 lanes, pick a big row tile, and keep
    # the grid >= 2 steps when possible (v7x dual TensorCore).
    bp = _round_up(B, 128)
    tm_cap = max(128, (block_rows // 128) * 128)
    n_steps = pl.cdiv(bp, tm_cap)
    if bp >= 256:
        n_steps = max(n_steps, 2)
    tm = _round_up(pl.cdiv(bp, n_steps), 128)
    bp = _round_up(bp, tm)
    grid = (bp // tm,)

    xt = jnp.zeros((D, bp), jnp.float32).at[:, :B].set(x.T.astype(jnp.float32))

    # VMEM per step (bytes/row): double-buffered x + out tiles, f32 temps, slop.
    out_bytes = jnp.dtype(out_dtype).itemsize
    per_row = (2 * 8 * 4                 # x tile (sublane-padded), double-buffered
               + 2 * CP * out_bytes      # out tile, double-buffered
               + (H1 + H2 + CP) * 4      # h1 / h2 / logits f32 temps
               + H1 * 4)                 # broadcast-temp headroom
    vmem_limit = int(min(max(1.5 * (tm * per_row + (1 << 20)), 16 << 20), 48 << 20))

    # Weights/biases: constant index_map -> DMA'd once, VMEM-resident.
    def const(a):
        return pl.BlockSpec(a.shape, lambda i: (0,) * a.ndim)

    cost = pl.CostEstimate(
        flops=2 * bp * (D * H1 + H1 * H2 + H2 * CP),
        transcendentals=0,
        bytes_accessed=bp * (D * 4 + CP * out_bytes)
        + sum(int(a.size) * a.dtype.itemsize
              for a in (w1t, b1c, w2t, b2c, w3t, b3c)),
    )

    out_t = pl.pallas_call(
        _mlp_kernel,
        out_shape=jax.ShapeDtypeStruct((CP, bp), out_dtype),
        grid_spec=pltpu.PrefetchScalarGridSpec(
            num_scalar_prefetch=0,
            grid=grid,
            in_specs=[
                pl.BlockSpec((D, tm), lambda i: (0, i)),   # batch streamed on lanes
                const(w1t), const(b1c),
                const(w2t), const(b2c),
                const(w3t), const(b3c),
            ],
            out_specs=pl.BlockSpec((CP, tm), lambda i: (0, i)),
        ),
        compiler_params=pltpu.CompilerParams(
            dimension_semantics=("parallel",),      # megacore on v7x
            vmem_limit_bytes=vmem_limit),
        cost_estimate=cost,
    )(xt, w1t, b1c, w2t, b2c, w3t, b3c)

    return out_t[:C, :B].T                         # back to (B, C)


def init_params(key, input_dim, num_classes):
    """Deterministic init mimicking torch.nn.Linear default U(-1/sqrt(fan_in), +)."""
    ks = jax.random.split(key, 6)

    def linear(kw, kb, fan_in, fan_out):
        bound = 1.0 / jnp.sqrt(fan_in)
        w = jax.random.uniform(kw, (fan_in, fan_out), jnp.float32, -bound, bound)
        b = jax.random.uniform(kb, (fan_out,), jnp.float32, -bound, bound)
        return w, b

    w1, b1 = linear(ks[0], ks[1], input_dim, H1)
    w2, b2 = linear(ks[2], ks[3], H1, H2)
    w3, b3 = linear(ks[4], ks[5], H2, num_classes)
    return {"w1": w1, "b1": b1, "w2": w2, "b2": b2, "w3": w3, "b3": b3}


def reference_forward_f32(x, p):
    h1 = jnp.maximum(x @ p["w1"] + p["b1"], 0.0)
    h2 = jnp.maximum(h1 @ p["w2"] + p["b2"], 0.0)
    return h2 @ p["w3"] + p["b3"]


def reference_forward_matched(x, p):
    """Mirrors the kernel's precision choices (bf16 MXU operands, f32 accum)."""
    h1 = jnp.maximum(x @ p["w1"] + p["b1"], 0.0)
    h2 = jnp.dot(h1.astype(jnp.bfloat16), p["w2"].astype(jnp.bfloat16),
                 preferred_element_type=jnp.float32)
    h2 = jnp.maximum(h2 + p["b2"], 0.0)
    out = jnp.dot(h2.astype(jnp.bfloat16), p["w3"].astype(jnp.bfloat16),
                  preferred_element_type=jnp.float32)
    return out + p["b3"]


if __name__ == "__main__":
    key = jax.random.PRNGKey(0)
    k_x, k_p = jax.random.split(key)

    batch = 300         # not a tile multiple -> exercises lane padding + 2-step grid
    input_dim = 3       # RGB color features
    num_classes = 5

    x = jax.random.uniform(k_x, (batch, input_dim), jnp.float32)
    params = init_params(k_p, input_dim, num_classes)

    out = color_classifier_forward(x, params)
    out = jax.block_until_ready(out)
    assert out.shape == (batch, num_classes)

    # Precision-matched reference (bf16 matmuls): tight check.
    ref_m = reference_forward_matched(x, params)
    assert jnp.allclose(out, ref_m, atol=2e-3, rtol=2e-3), "mismatch vs matched ref"

    # Full-f32 reference: loose sanity check of the module semantics.
    ref_f32 = reference_forward_f32(x, params)
    assert jnp.allclose(out, ref_f32, atol=3e-1, rtol=1e-1), "mismatch vs f32 ref"

    print("KERNEL_OK")
</pallas_src>

<mosaic_0001>
module attributes {stable_mosaic.version = 11 : i64} {
  func.func @_mlp_kernel(%arg0: i32, %arg1: memref<3x256xf32, #tpu.memory_space<vmem>>, %arg2: memref<64x3xf32, #tpu.memory_space<vmem>>, %arg3: memref<64x1xf32, #tpu.memory_space<vmem>>, %arg4: memref<32x64xbf16, #tpu.memory_space<vmem>>, %arg5: memref<32x1xf32, #tpu.memory_space<vmem>>, %arg6: memref<8x32xbf16, #tpu.memory_space<vmem>>, %arg7: memref<8x1xf32, #tpu.memory_space<vmem>>, %arg8: memref<8x256xf32, #tpu.memory_space<vmem>>) attributes {dimension_semantics = [#tpu.dimension_semantics<parallel>], iteration_bounds = array<i64: 2>, scalar_prefetch = 0 : i64, scratch_operands = 0 : i64, tpu.core_type = #tpu.core_type<tc>, window_params = [{transform_indices = @transform_0, window_bounds = array<i64: 3, 256>}, {pipeline_mode = #tpu.pipeline_mode<synchronous>, transform_indices = @transform_1, window_bounds = array<i64: 64, 3>}, {pipeline_mode = #tpu.pipeline_mode<synchronous>, transform_indices = @transform_2, window_bounds = array<i64: 64, 1>}, {pipeline_mode = #tpu.pipeline_mode<synchronous>, transform_indices = @transform_3, window_bounds = array<i64: 32, 64>}, {pipeline_mode = #tpu.pipeline_mode<synchronous>, transform_indices = @transform_4, window_bounds = array<i64: 32, 1>}, {pipeline_mode = #tpu.pipeline_mode<synchronous>, transform_indices = @transform_5, window_bounds = array<i64: 8, 32>}, {pipeline_mode = #tpu.pipeline_mode<synchronous>, transform_indices = @transform_6, window_bounds = array<i64: 8, 1>}, {transform_indices = @transform_7, window_bounds = array<i64: 8, 256>}]} {
    %c0 = arith.constant 0 : index
    %c0_0 = arith.constant 0 : index
    %0 = vector.load %arg1[%c0, %c0_0] : memref<3x256xf32, #tpu.memory_space<vmem>>, vector<3x256xf32>
    %c0_1 = arith.constant 0 : index
    %c0_2 = arith.constant 0 : index
    %1 = vector.load %arg2[%c0_1, %c0_2] : memref<64x3xf32, #tpu.memory_space<vmem>>, vector<64x1xf32>
    %2 = vector.extract_strided_slice %0 {offsets = [0, 0], sizes = [1, 256], strides = [1, 1]} : vector<3x256xf32> to vector<1x256xf32>
    %3 = vector.broadcast %1 : vector<64x1xf32> to vector<64x256xf32>
    %4 = vector.broadcast %2 : vector<1x256xf32> to vector<64x256xf32>
    %5 = arith.mulf %3, %4 : vector<64x256xf32>
    %c0_3 = arith.constant 0 : index
    %c1 = arith.constant 1 : index
    %6 = vector.load %arg2[%c0_3, %c1] : memref<64x3xf32, #tpu.memory_space<vmem>>, vector<64x1xf32>
    %7 = vector.extract_strided_slice %0 {offsets = [1, 0], sizes = [1, 256], strides = [1, 1]} : vector<3x256xf32> to vector<1x256xf32>
    %8 = vector.broadcast %6 : vector<64x1xf32> to vector<64x256xf32>
    %9 = vector.broadcast %7 : vector<1x256xf32> to vector<64x256xf32>
    %10 = arith.mulf %8, %9 : vector<64x256xf32>
    %11 = arith.addf %5, %10 : vector<64x256xf32>
    %c0_4 = arith.constant 0 : index
    %c2 = arith.constant 2 : index
    %12 = vector.load %arg2[%c0_4, %c2] : memref<64x3xf32, #tpu.memory_space<vmem>>, vector<64x1xf32>
    %13 = vector.extract_strided_slice %0 {offsets = [2, 0], sizes = [1, 256], strides = [1, 1]} : vector<3x256xf32> to vector<1x256xf32>
    %14 = vector.broadcast %12 : vector<64x1xf32> to vector<64x256xf32>
    %15 = vector.broadcast %13 : vector<1x256xf32> to vector<64x256xf32>
    %16 = arith.mulf %14, %15 : vector<64x256xf32>
    %17 = arith.addf %11, %16 : vector<64x256xf32>
    %c0_5 = arith.constant 0 : index
    %c0_6 = arith.constant 0 : index
    %18 = vector.load %arg3[%c0_5, %c0_6] : memref<64x1xf32, #tpu.memory_space<vmem>>, vector<64x1xf32>
    %19 = vector.broadcast %18 : vector<64x1xf32> to vector<64x256xf32>
    %20 = arith.addf %17, %19 : vector<64x256xf32>
    %cst = arith.constant 0.000000e+00 : f32
    %21 = vector.broadcast %cst : f32 to vector<64x256xf32>
    %22 = arith.maximumf %20, %21 : vector<64x256xf32>
    %c0_7 = arith.constant 0 : index
    %c0_8 = arith.constant 0 : index
    %23 = vector.load %arg4[%c0_7, %c0_8] : memref<32x64xbf16, #tpu.memory_space<vmem>>, vector<32x64xbf16>
    %24 = arith.truncf %22 : vector<64x256xf32> to vector<64x256xbf16>
    %cst_9 = arith.constant dense<0.000000e+00> : vector<32x256xf32>
    %25 = tpu.matmul %23, %24, %cst_9 {dimension_numbers = #tpu.dot_dimension_numbers<[1], [0], [0], [1], [0, 0, 1, 1], [], []>} : vector<32x64xbf16>, vector<64x256xbf16>, vector<32x256xf32> -> vector<32x256xf32>
    %c0_10 = arith.constant 0 : index
    %c0_11 = arith.constant 0 : index
    %26 = vector.load %arg5[%c0_10, %c0_11] : memref<32x1xf32, #tpu.memory_space<vmem>>, vector<32x1xf32>
    %27 = vector.broadcast %26 : vector<32x1xf32> to vector<32x256xf32>
    %28 = arith.addf %25, %27 : vector<32x256xf32>
    %cst_12 = arith.constant 0.000000e+00 : f32
    %29 = vector.broadcast %cst_12 : f32 to vector<32x256xf32>
    %30 = arith.maximumf %28, %29 : vector<32x256xf32>
    %c0_13 = arith.constant 0 : index
    %c0_14 = arith.constant 0 : index
    %31 = vector.load %arg6[%c0_13, %c0_14] : memref<8x32xbf16, #tpu.memory_space<vmem>>, vector<8x32xbf16>
    %32 = arith.truncf %30 : vector<32x256xf32> to vector<32x256xbf16>
    %cst_15 = arith.constant dense<0.000000e+00> : vector<8x256xf32>
    %33 = tpu.matmul %31, %32, %cst_15 {dimension_numbers = #tpu.dot_dimension_numbers<[1], [0], [0], [1], [0, 0, 1, 1], [], []>} : vector<8x32xbf16>, vector<32x256xbf16>, vector<8x256xf32> -> vector<8x256xf32>
    %c0_16 = arith.constant 0 : index
    %c0_17 = arith.constant 0 : index
    %34 = vector.load %arg7[%c0_16, %c0_17] : memref<8x1xf32, #tpu.memory_space<vmem>>, vector<8x1xf32>
    %35 = vector.broadcast %34 : vector<8x1xf32> to vector<8x256xf32>
    %36 = arith.addf %33, %35 : vector<8x256xf32>
    %c0_18 = arith.constant 0 : index
    %c0_19 = arith.constant 0 : index
    %37 = vector.load %arg8[%c0_18, %c0_19] : memref<8x256xf32, #tpu.memory_space<vmem>>, vector<8x256xf32>
    tpu.vector_store %arg8[%c0_18, %c0_19], %36 {strides = array<i32>} : memref<8x256xf32, #tpu.memory_space<vmem>>, vector<8x256xf32>,
    return
  }
  func.func @transform_0(%arg0: i32) -> (i32, i32) {
    %c0_i32 = arith.constant 0 : i32
    %c0_i32_0 = arith.constant 0 : i32
    return %c0_i32, %arg0 : i32, i32
  }
  func.func @transform_1(%arg0: i32) -> (i32, i32) {
    %c0_i32 = arith.constant 0 : i32
    %c0_i32_0 = arith.constant 0 : i32
    %c0_i32_1 = arith.constant 0 : i32
    return %c0_i32, %c0_i32_0 : i32, i32
  }
  func.func @transform_2(%arg0: i32) -> (i32, i32) {
    %c0_i32 = arith.constant 0 : i32
    %c0_i32_0 = arith.constant 0 : i32
    %c0_i32_1 = arith.constant 0 : i32
    return %c0_i32, %c0_i32_0 : i32, i32
  }
  func.func @transform_3(%arg0: i32) -> (i32, i32) {
    %c0_i32 = arith.constant 0 : i32
    %c0_i32_0 = arith.constant 0 : i32
    %c0_i32_1 = arith.constant 0 : i32
    return %c0_i32, %c0_i32_0 : i32, i32
  }
  func.func @transform_4(%arg0: i32) -> (i32, i32) {
    %c0_i32 = arith.constant 0 : i32
    %c0_i32_0 = arith.constant 0 : i32
    %c0_i32_1 = arith.constant 0 : i32
    return %c0_i32, %c0_i32_0 : i32, i32
  }
  func.func @transform_5(%arg0: i32) -> (i32, i32) {
    %c0_i32 = arith.constant 0 : i32
    %c0_i32_0 = arith.constant 0 : i32
    %c0_i32_1 = arith.constant 0 : i32
    return %c0_i32, %c0_i32_0 : i32, i32
  }
  func.func @transform_6(%arg0: i32) -> (i32, i32) {
    %c0_i32 = arith.constant 0 : i32
    %c0_i32_0 = arith.constant 0 : i32
    %c0_i32_1 = arith.constant 0 : i32
    return %c0_i32, %c0_i32_0 : i32, i32
  }
  func.func @transform_7(%arg0: i32) -> (i32, i32) {
    %c0_i32 = arith.constant 0 : i32
    %c0_i32_0 = arith.constant 0 : i32
    return %c0_i32, %arg0 : i32, i32
  }
}

</mosaic_0001>

<llo_original>
// kernel: tpu_custom_call.1
$region0: #{tpu_custom_call.1}
  #allocation0 [shape = 'u32[]', space=smem, size = 0x4, offset = 0x4, fixed_abs, tag = 'smem constant byte address 0x4 - core index']
  #allocation1 [shape = 'u32[144,128]{1,0:T(1,128)}', space=vmem, size = 0x12000, scoped, tag = 'internal scratch']
  %s0 = inlined_call_operand.vmem [shape: f32[3,512], index: 0, kind: input, shape index: {}]
  %s1 = inlined_call_operand.vmem [shape: f32[64,3], index: 1, kind: input, shape index: {}]
  %s2 = inlined_call_operand.vmem [shape: f32[64,1], index: 2, kind: input, shape index: {}]
  %s3 = inlined_call_operand.vmem [shape: bf16[32,64], index: 3, kind: input, shape index: {}]
  %s4 = inlined_call_operand.vmem [shape: f32[32,1], index: 4, kind: input, shape index: {}]
  %s5 = inlined_call_operand.vmem [shape: bf16[8,32], index: 5, kind: input, shape index: {}]
  %s6 = inlined_call_operand.vmem [shape: f32[8,1], index: 6, kind: input, shape index: {}]
  %s7 = inlined_call_operand.hbm [shape: f32[8,512], index: 7, kind: output, shape index: {}]
  %s8 = sld [smem:[#allocation0]]
  $region61: #{tpu_custom_call.1} parent=0
    _
  %s10 = ssub.s32 1, %s8
  %s11 = scalar_select 0, %s10, %s8
  $region1: #{tpu_custom_call.1} parent=0
    #allocation2 [shape = 'u8[16384]{0}', space=vmem, size = 0x4000, scoped, tag = 'output window, operand 0']
    #allocation3 [shape = 's32[2]{0}', space=sflag, size = 0x8, scoped, tag = 'scoped memory for tpu_custom_call.1']
    %12 = vsyncpa [#allocation3], 0
    %s13 = scalar_lea.sflag [#allocation3], 1
    %14 = vsyncpa %s13, 0
    loop: start=0, step=1, limit=4
    $region2: #{tpu_custom_call.1} parent=1 // loop_pre_header
      _
    $region3: #{tpu_custom_call.1} parent=1 // loop_header
      %s16 = sphi 0, %s20
      %p17 = scmp.ge.s32.totalorder %s16, 4
      %s26 = sphi 0, %s28
      %s29 = sphi 0, %s26
      %s30 = sphi 0, %s29
      %s46 = sphi 0, %s30
      %s50 = sphi 0, %s50
      %s52 = sphi 0, %s50
      %s53 = sphi 0, %s52
      %s67 = sphi 0, %s53
      %s71 = sphi 0, %s71
      %s73 = sphi 0, %s71
      %s74 = sphi 0, %s73
      %s88 = sphi 0, %s74
      %s92 = sphi 0, %s92
      %s94 = sphi 0, %s92
      %s95 = sphi 0, %s94
      %s109 = sphi 0, %s95
      %s113 = sphi 0, %s113
      %s115 = sphi 0, %s113
      %s116 = sphi 0, %s115
      %s130 = sphi 0, %s116
      %s134 = sphi 0, %s134
      %s136 = sphi 0, %s134
      %s137 = sphi 0, %s136
      %s151 = sphi 0, %s137
      %s155 = sphi 0, %s155
      %s157 = sphi 0, %s155
      %s158 = sphi 0, %s157
      %s172 = sphi 0, %s158
      %s178 = sphi 0, %s180
      %s181 = sphi 0, %s178
      %s182 = sphi 0, %s181
      %s198 = sphi 0, %s182
    $region4: #{tpu_custom_call.1} parent=1 // loop_header_branch
      %19 = sbr.rel (%p17) target = $region8
    $region5: #{tpu_custom_call.1} parent=1 // loop_body
      %s21 = ssub.s32 %s16, 1
      %s22 = ssub.s32 %s16, 2
      %s23 = sadd.s32 %s16, 1
      %s24 = ssub.s32 %s16, %s23
      %p25 = scmp.eq.s32.totalorder %s24, 0
      %s27 = sadd.s32 %s26, 1
      %s28 = scalar_select %p25, %s26, %s27
      %p31 = pneg %p25
      %p32 = scmp.eq.s32.totalorder %s16, 1
      %p33 = por %p31, %p32
      %p34 = scmp.ne.s32.totalorder %s26, %s29
      %p35 = scmp.eq.s32.totalorder %s16, 0
      %p36 = por %p34, %p35
      %p37 = scmp.ne.s32.totalorder %s26, %s29
      %p38 = scmp.eq.s32.totalorder %s21, 1
      %p39 = por %p37, %p38
      %p40 = scmp.ne.s32.totalorder %s29, %s30
      %p41 = scmp.eq.s32.totalorder %s21, 0
      %p42 = por %p40, %p41
      %p43 = scmp.ne.s32.totalorder %s29, %s30
      %p44 = scmp.eq.s32.totalorder %s22, 1
      %p45 = por %p43, %p44
      %p47 = scmp.ne.s32.totalorder %s30, %s46
      %p48 = scmp.eq.s32.totalorder %s22, 0
      %p49 = por %p47, %p48
      %s51 = sadd.s32 %s50, 1
      %p54 = scmp.eq.s32.totalorder %s16, 1
      %p55 = scmp.ne.s32.totalorder %s50, %s52
      %p56 = scmp.eq.s32.totalorder %s16, 0
      %p57 = por %p55, %p56
      %p58 = scmp.ne.s32.totalorder %s50, %s52
      %p59 = scmp.eq.s32.totalorder %s21, 1
      %p60 = por %p58, %p59
      %p61 = scmp.ne.s32.totalorder %s52, %s53
      %p62 = scmp.eq.s32.totalorder %s21, 0
      %p63 = por %p61, %p62
      %p64 = scmp.ne.s32.totalorder %s52, %s53
      %p65 = scmp.eq.s32.totalorder %s22, 1
      %p66 = por %p64, %p65
      %p68 = scmp.ne.s32.totalorder %s53, %s67
      %p69 = scmp.eq.s32.totalorder %s22, 0
      %p70 = por %p68, %p69
      %s72 = sadd.s32 %s71, 1
      %p75 = scmp.eq.s32.totalorder %s16, 1
      %p76 = scmp.ne.s32.totalorder %s71, %s73
      %p77 = scmp.eq.s32.totalorder %s16, 0
      %p78 = por %p76, %p77
      %p79 = scmp.ne.s32.totalorder %s71, %s73
      %p80 = scmp.eq.s32.totalorder %s21, 1
      %p81 = por %p79, %p80
      %p82 = scmp.ne.s32.totalorder %s73, %s74
      %p83 = scmp.eq.s32.totalorder %s21, 0
      %p84 = por %p82, %p83
      %p85 = scmp.ne.s32.totalorder %s73, %s74
      %p86 = scmp.eq.s32.totalorder %s22, 1
      %p87 = por %p85, %p86
      %p89 = scmp.ne.s32.totalorder %s74, %s88
      %p90 = scmp.eq.s32.totalorder %s22, 0
      %p91 = por %p89, %p90
      %s93 = sadd.s32 %s92, 1
      %p96 = scmp.eq.s32.totalorder %s16, 1
      %p97 = scmp.ne.s32.totalorder %s92, %s94
      %p98 = scmp.eq.s32.totalorder %s16, 0
      %p99 = por %p97, %p98
      %p100 = scmp.ne.s32.totalorder %s92, %s94
      %p101 = scmp.eq.s32.totalorder %s21, 1
      %p102 = por %p100, %p101
      %p103 = scmp.ne.s32.totalorder %s94, %s95
      %p104 = scmp.eq.s32.totalorder %s21, 0
      %p105 = por %p103, %p104
      %p106 = scmp.ne.s32.totalorder %s94, %s95
      %p107 = scmp.eq.s32.totalorder %s22, 1
      %p108 = por %p106, %p107
      %p110 = scmp.ne.s32.totalorder %s95, %s109
      %p111 = scmp.eq.s32.totalorder %s22, 0
      %p112 = por %p110, %p111
      %s114 = sadd.s32 %s113, 1
      %p117 = scmp.eq.s32.totalorder %s16, 1
      %p118 = scmp.ne.s32.totalorder %s113, %s115
      %p119 = scmp.eq.s32.totalorder %s16, 0
      %p120 = por %p118, %p119
      %p121 = scmp.ne.s32.totalorder %s113, %s115
      %p122 = scmp.eq.s32.totalorder %s21, 1
      %p123 = por %p121, %p122
      %p124 = scmp.ne.s32.totalorder %s115, %s116
      %p125 = scmp.eq.s32.totalorder %s21, 0
      %p126 = por %p124, %p125
      %p127 = scmp.ne.s32.totalorder %s115, %s116
      %p128 = scmp.eq.s32.totalorder %s22, 1
      %p129 = por %p127, %p128
      %p131 = scmp.ne.s32.totalorder %s116, %s130
      %p132 = scmp.eq.s32.totalorder %s22, 0
      %p133 = por %p131, %p132
      %s135 = sadd.s32 %s134, 1
      %p138 = scmp.eq.s32.totalorder %s16, 1
      %p139 = scmp.ne.s32.totalorder %s134, %s136
      %p140 = scmp.eq.s32.totalorder %s16, 0
      %p141 = por %p139, %p140
      %p142 = scmp.ne.s32.totalorder %s134, %s136
      %p143 = scmp.eq.s32.totalorder %s21, 1
      %p144 = por %p142, %p143
      %p145 = scmp.ne.s32.totalorder %s136, %s137
      %p146 = scmp.eq.s32.totalorder %s21, 0
      %p147 = por %p145, %p146
      %p148 = scmp.ne.s32.totalorder %s136, %s137
      %p149 = scmp.eq.s32.totalorder %s22, 1
      %p150 = por %p148, %p149
      %p152 = scmp.ne.s32.totalorder %s137, %s151
      %p153 = scmp.eq.s32.totalorder %s22, 0
      %p154 = por %p152, %p153
      %s156 = sadd.s32 %s155, 1
      %p159 = scmp.eq.s32.totalorder %s16, 1
      %p160 = scmp.ne.s32.totalorder %s155, %s157
      %p161 = scmp.eq.s32.totalorder %s16, 0
      %p162 = por %p160, %p161
      %p163 = scmp.ne.s32.totalorder %s155, %s157
      %p164 = scmp.eq.s32.totalorder %s21, 1
      %p165 = por %p163, %p164
      %p166 = scmp.ne.s32.totalorder %s157, %s158
      %p167 = scmp.eq.s32.totalorder %s21, 0
      %p168 = por %p166, %p167
      %p169 = scmp.ne.s32.totalorder %s157, %s158
      %p170 = scmp.eq.s32.totalorder %s22, 1
      %p171 = por %p169, %p170
      %p173 = scmp.ne.s32.totalorder %s158, %s172
      %p174 = scmp.eq.s32.totalorder %s22, 0
      %p175 = por %p173, %p174
      %s176 = ssub.s32 %s16, %s23
      %p177 = scmp.eq.s32.totalorder %s176, 0
      %s179 = sadd.s32 %s178, 1
      %s180 = scalar_select %p177, %s178, %s179
      %p183 = pneg %p177
      %p184 = scmp.eq.s32.totalorder %s16, 1
      %p185 = por %p183, %p184
      %p186 = scmp.ne.s32.totalorder %s178, %s181
      %p187 = scmp.eq.s32.totalorder %s16, 0
      %p188 = por %p186, %p187
      %p189 = scmp.ne.s32.totalorder %s178, %s181
      %p190 = scmp.eq.s32.totalorder %s21, 1
      %p191 = por %p189, %p190
      %p192 = scmp.ne.s32.totalorder %s181, %s182
      %p193 = scmp.eq.s32.totalorder %s21, 0
      %p194 = por %p192, %p193
      %p195 = scmp.ne.s32.totalorder %s181, %s182
      %p196 = scmp.eq.s32.totalorder %s22, 1
      %p197 = por %p195, %p196
      %p199 = scmp.ne.s32.totalorder %s182, %s198
      %p200 = scmp.eq.s32.totalorder %s22, 0
      %p201 = por %p199, %p200
      %p202 = scmp.le.s32.totalorder 1, %s16
      %p203 = scmp.lt.s32.totalorder %s16, 3
      %p204 = pnand %p202, %p203
      %p205 = pneg %p204
      // Predicated region
      $region9: #{tpu_custom_call.1} parent=5 // pred_check
        _
      $region10: #{tpu_custom_call.1} parent=5 // pred_check_branch
        %207 = sbr.rel (%p204) target = $region12
      $region11: #{tpu_custom_call.1} parent=5 // pred_region
        %s208 = ssub.s32 %s16, 1
        // Predicated region
        $region13: #{tpu_custom_call.1} parent=11 // pred_check
          %p209 = pneg %p63
        $region14: #{tpu_custom_call.1} parent=11 // pred_check_branch
          %211 = sbr.rel (%p209) target = $region16
        $region15: #{tpu_custom_call.1} parent=11 // pred_region
          _
        $region16: #{tpu_custom_call.1} parent=11 // pred_fallthru
          _
        // Predicated region
        $region17: #{tpu_custom_call.1} parent=11 // pred_check
          %p212 = pneg %p84
        $region18: #{tpu_custom_call.1} parent=11 // pred_check_branch
          %214 = sbr.rel (%p212) target = $region20
        $region19: #{tpu_custom_call.1} parent=11 // pred_region
          _
        $region20: #{tpu_custom_call.1} parent=11 // pred_fallthru
          _
        // Predicated region
        $region21: #{tpu_custom_call.1} parent=11 // pred_check
          %p215 = pneg %p105
        $region22: #{tpu_custom_call.1} parent=11 // pred_check_branch
          %217 = sbr.rel (%p215) target = $region24
        $region23: #{tpu_custom_call.1} parent=11 // pred_region
          _
        $region24: #{tpu_custom_call.1} parent=11 // pred_fallthru
          _
        // Predicated region
        $region25: #{tpu_custom_call.1} parent=11 // pred_check
          %p218 = pneg %p126
        $region26: #{tpu_custom_call.1} parent=11 // pred_check_branch
          %220 = sbr.rel (%p218) target = $region28
        $region27: #{tpu_custom_call.1} parent=11 // pred_region
          _
        $region28: #{tpu_custom_call.1} parent=11 // pred_fallthru
          _
        // Predicated region
        $region29: #{tpu_custom_call.1} parent=11 // pred_check
          %p221 = pneg %p147
        $region30: #{tpu_custom_call.1} parent=11 // pred_check_branch
          %223 = sbr.rel (%p221) target = $region32
        $region31: #{tpu_custom_call.1} parent=11 // pred_region
          _
        $region32: #{tpu_custom_call.1} parent=11 // pred_fallthru
          _
        // Predicated region
        $region33: #{tpu_custom_call.1} parent=11 // pred_check
          %p224 = pneg %p168
        $region34: #{tpu_custom_call.1} parent=11 // pred_check_branch
          %226 = sbr.rel (%p224) target = $region36
        $region35: #{tpu_custom_call.1} parent=11 // pred_region
          _
        $region36: #{tpu_custom_call.1} parent=11 // pred_fallthru
          _
      $region12: #{tpu_custom_call.1} parent=5 // pred_fallthru
        _
      %p227 = scmp.lt.s32.totalorder %s16, 2
      // Predicated region
      $region37: #{tpu_custom_call.1} parent=5 // pred_check
        %p228 = pneg %p227
      $region38: #{tpu_custom_call.1} parent=5 // pred_check_branch
        %230 = sbr.rel (%p228) target = $region40
      $region39: #{tpu_custom_call.1} parent=5 // pred_region
        // Predicated region
        $region41: #{tpu_custom_call.1} parent=39 // pred_check
          %p231 = pneg %p36
        $region42: #{tpu_custom_call.1} parent=39 // pred_check_branch
          %233 = sbr.rel (%p231) target = $region44
        $region43: #{tpu_custom_call.1} parent=39 // pred_region
          %s234 = smul.u32 2, %s16
          %p235 = scmp.lt.s32.totalorder %s234, 3
          %s236 = scalar_select %p235, %s234, 3
          %s237 = smul.addr %s236, 4
          %s238 = scalar_lea.vmem %s0, %s237
          %s239 = smul.u32 2, %s16
        $region44: #{tpu_custom_call.1} parent=39 // pred_fallthru
          _
      $region40: #{tpu_custom_call.1} parent=5 // pred_fallthru
        _
      %p240 = scmp.le.s32.totalorder 1, %s16
      %p241 = scmp.lt.s32.totalorder %s16, 3
      %p242 = pnand %p240, %p241
      %p243 = pneg %p242
      // Predicated region
      $region45: #{tpu_custom_call.1} parent=5 // pred_check
        _
      $region46: #{tpu_custom_call.1} parent=5 // pred_check_branch
        %245 = sbr.rel (%p242) target = $region48
      $region47: #{tpu_custom_call.1} parent=5 // pred_region
        %s246 = ssub.s32 %s16, 1
        %s247 = smul.u32 2, %s21
        %p248 = scmp.lt.s32.totalorder %s247, 3
        %s249 = scalar_select %p248, %s247, 3
        %s250 = smul.addr %s249, 4
        %s251 = scalar_lea.vmem %s0, %s250
        %p252 = pneg %p42
        %p253 = pneg %p39
        %p254 = pneg %p63
        %p255 = pneg %p60
        %p256 = pneg %p84
        %p257 = pneg %p81
        %p258 = pneg %p105
        %p259 = pneg %p102
        %p260 = pneg %p126
        %p261 = pneg %p123
        %p262 = pneg %p147
        %p263 = pneg %p144
        %p264 = pneg %p168
        %p265 = pneg %p165
        %p266 = pneg %p194
        %p267 = pneg %p191
        %s268 = sand.u32 %s181, 1
        %s269 = scalar_lea.sflag [#allocation3], %s268
        %s270 = sand.u32 %s181, 1
        %s271 = smul.addr %s270, 16
        %s272 = scalar_lea.vmem [#allocation2], %s271
        %s273 = smul.u32 2, %s21
        %p274 = scmp.lt.s32.totalorder %s273, 3
        %s275 = scalar_select %p274, %s273, 3
        %s276 = smul.addr %s275, 4
        %s277 = scalar_lea.vmem %s0, %s276
        %s278 = smul.u32 2, %s21
        %s279 = smul.u32 2, %s21
        %v281 = vld [vmem:[%s277] sm:$0x77]
        %v282 = vld [vmem:[%s1] sm:$0xff]
        %v283 = vld [vmem:[%s1 + $0x8] sm:$0xff]
        %v284 = vld [vmem:[%s1 + $0x10] sm:$0xff]
        %v285 = vld [vmem:[%s1 + $0x18] sm:$0xff]
        %v286 = vld [vmem:[%s1 + $0x20] sm:$0xff]
        %v287 = vld [vmem:[%s1 + $0x28] sm:$0xff]
        %v288 = vld [vmem:[%s1 + $0x30] sm:$0xff]
        %v289 = vld [vmem:[%s1 + $0x38] sm:$0xff]
        %291 = vset.pattern.permute.xlu0 0
        %292 = vperm.xlu0 %291, %v282
        %v293 = vpop.permute.xlu0 %292
        %296 = vset.pattern.permute.xlu0 0
        %297 = vperm.xlu0 %296, %v283
        %v298 = vpop.permute.xlu0 %297
        %301 = vset.pattern.permute.xlu0 0
        %302 = vperm.xlu0 %301, %v284
        %v303 = vpop.permute.xlu0 %302
        %306 = vset.pattern.permute.xlu0 0
        %307 = vperm.xlu0 %306, %v285
        %v308 = vpop.permute.xlu0 %307
        %311 = vset.pattern.permute.xlu0 0
        %312 = vperm.xlu0 %311, %v286
        %v313 = vpop.permute.xlu0 %312
        %316 = vset.pattern.permute.xlu0 0
        %317 = vperm.xlu0 %316, %v287
        %v318 = vpop.permute.xlu0 %317
        %321 = vset.pattern.permute.xlu0 0
        %322 = vperm.xlu0 %321, %v288
        %v323 = vpop.permute.xlu0 %322
        %326 = vset.pattern.permute.xlu0 0
        %327 = vperm.xlu0 %326, %v289
        %v328 = vpop.permute.xlu0 %327
        %v331 = vlaneseq
        %v332 = vshrl.u32 %v331, 7
        %v333 = vsub.s32 0, %v332
        %v334 = vrot.slane %v281, %v333
        %v335 = vlaneseq
        %v336 = vshrl.u32 %v335, 7
        %v337 = vsub.s32 4, %v336
        %v338 = vrot.slane %v281, %v337
        %v341 = vlaneseq
        %v342 = vshrl.u32 %v341, 7
        %v343 = vsub.s32 0, %v342
        %v344 = vrot.slane %v334, %v343
        %v345 = vlaneseq
        %v346 = vshrl.u32 %v345, 7
        %v347 = vsub.s32 0, %v346
        %v348 = vrot.slane %v338, %v347
        %v349 = vmul.f32 %v293, %v344
        %v350 = vmul.f32 %v293, %v348
        %v351 = vmul.f32 %v298, %v344
        %v352 = vmul.f32 %v298, %v348
        %v353 = vmul.f32 %v303, %v344
        %v354 = vmul.f32 %v303, %v348
        %v355 = vmul.f32 %v308, %v344
        %v356 = vmul.f32 %v308, %v348
        %v357 = vmul.f32 %v313, %v344
        %v358 = vmul.f32 %v313, %v348
        %v359 = vmul.f32 %v318, %v344
        %v360 = vmul.f32 %v318, %v348
        %v361 = vmul.f32 %v323, %v344
        %v362 = vmul.f32 %v323, %v348
        %v363 = vmul.f32 %v328, %v344
        %v364 = vmul.f32 %v328, %v348
        %365 = vset.pattern.permute.xlu0 1
        %366 = vperm.xlu0 %365, %v282
        %v367 = vpop.permute.xlu0 %366
        %369 = vset.pattern.permute.xlu0 1
        %370 = vperm.xlu0 %369, %v283
        %v371 = vpop.permute.xlu0 %370
        %373 = vset.pattern.permute.xlu0 1
        %374 = vperm.xlu0 %373, %v284
        %v375 = vpop.permute.xlu0 %374
        %377 = vset.pattern.permute.xlu0 1
        %378 = vperm.xlu0 %377, %v285
        %v379 = vpop.permute.xlu0 %378
        %381 = vset.pattern.permute.xlu0 1
        %382 = vperm.xlu0 %381, %v286
        %v383 = vpop.permute.xlu0 %382
        %385 = vset.pattern.permute.xlu0 1
        %386 = vperm.xlu0 %385, %v287
        %v387 = vpop.permute.xlu0 %386
        %389 = vset.pattern.permute.xlu0 1
        %390 = vperm.xlu0 %389, %v288
        %v391 = vpop.permute.xlu0 %390
        %393 = vset.pattern.permute.xlu0 1
        %394 = vperm.xlu0 %393, %v289
        %v395 = vpop.permute.xlu0 %394
        %v397 = vlaneseq
        %v398 = vshrl.u32 %v397, 7
        %v399 = vsub.s32 1, %v398
        %v400 = vrot.slane %v281, %v399
        %v401 = vlaneseq
        %v402 = vshrl.u32 %v401, 7
        %v403 = vsub.s32 5, %v402
        %v404 = vrot.slane %v281, %v403
        %v407 = vlaneseq
        %v408 = vshrl.u32 %v407, 7
        %v409 = vsub.s32 1, %v408
        %v410 = vrot.slane %v400, %v409
        %v411 = vlaneseq
        %v412 = vshrl.u32 %v411, 7
        %v413 = vsub.s32 1, %v412
        %v414 = vrot.slane %v404, %v413
        %v415 = vmul.f32 %v367, %v410
        %v416 = vmul.f32 %v367, %v414
        %v417 = vmul.f32 %v371, %v410
        %v418 = vmul.f32 %v371, %v414
        %v419 = vmul.f32 %v375, %v410
        %v420 = vmul.f32 %v375, %v414
        %v421 = vmul.f32 %v379, %v410
        %v422 = vmul.f32 %v379, %v414
        %v423 = vmul.f32 %v383, %v410
        %v424 = vmul.f32 %v383, %v414
        %v425 = vmul.f32 %v387, %v410
        %v426 = vmul.f32 %v387, %v414
        %v427 = vmul.f32 %v391, %v410
        %v428 = vmul.f32 %v391, %v414
        %v429 = vmul.f32 %v395, %v410
        %v430 = vmul.f32 %v395, %v414
        %v431 = vadd.f32 %v349, %v415
        %v432 = vadd.f32 %v350, %v416
        %v433 = vadd.f32 %v351, %v417
        %v434 = vadd.f32 %v352, %v418
        %v435 = vadd.f32 %v353, %v419
        %v436 = vadd.f32 %v354, %v420
        %v437 = vadd.f32 %v355, %v421
        %v438 = vadd.f32 %v356, %v422
        %v439 = vadd.f32 %v357, %v423
        %v440 = vadd.f32 %v358, %v424
        %v441 = vadd.f32 %v359, %v425
        %v442 = vadd.f32 %v360, %v426
        %v443 = vadd.f32 %v361, %v427
        %v444 = vadd.f32 %v362, %v428
        %v445 = vadd.f32 %v363, %v429
        %v446 = vadd.f32 %v364, %v430
        %447 = vset.pattern.permute.xlu0 2
        %448 = vperm.xlu0 %447, %v282
        %v449 = vpop.permute.xlu0 %448
        %451 = vset.pattern.permute.xlu0 2
        %452 = vperm.xlu0 %451, %v283
        %v453 = vpop.permute.xlu0 %452
        %455 = vset.pattern.permute.xlu0 2
        %456 = vperm.xlu0 %455, %v284
        %v457 = vpop.permute.xlu0 %456
        %459 = vset.pattern.permute.xlu0 2
        %460 = vperm.xlu0 %459, %v285
        %v461 = vpop.permute.xlu0 %460
        %463 = vset.pattern.permute.xlu0 2
        %464 = vperm.xlu0 %463, %v286
        %v465 = vpop.permute.xlu0 %464
        %467 = vset.pattern.permute.xlu0 2
        %468 = vperm.xlu0 %467, %v287
        %v469 = vpop.permute.xlu0 %468
        %471 = vset.pattern.permute.xlu0 2
        %472 = vperm.xlu0 %471, %v288
        %v473 = vpop.permute.xlu0 %472
        %475 = vset.pattern.permute.xlu0 2
        %476 = vperm.xlu0 %475, %v289
        %v477 = vpop.permute.xlu0 %476
        %v479 = vlaneseq
        %v480 = vshrl.u32 %v479, 7
        %v481 = vsub.s32 2, %v480
        %v482 = vrot.slane %v281, %v481
        %v483 = vlaneseq
        %v484 = vshrl.u32 %v483, 7
        %v485 = vsub.s32 6, %v484
        %v486 = vrot.slane %v281, %v485
        %v489 = vlaneseq
        %v490 = vshrl.u32 %v489, 7
        %v491 = vsub.s32 2, %v490
        %v492 = vrot.slane %v482, %v491
        %v493 = vlaneseq
        %v494 = vshrl.u32 %v493, 7
        %v495 = vsub.s32 2, %v494
        %v496 = vrot.slane %v486, %v495
        %v497 = vmul.f32 %v449, %v492
        %v498 = vmul.f32 %v449, %v496
        %v499 = vmul.f32 %v453, %v492
        %v500 = vmul.f32 %v453, %v496
        %v501 = vmul.f32 %v457, %v492
        %v502 = vmul.f32 %v457, %v496
        %v503 = vmul.f32 %v461, %v492
        %v504 = vmul.f32 %v461, %v496
        %v505 = vmul.f32 %v465, %v492
        %v506 = vmul.f32 %v465, %v496
        %v507 = vmul.f32 %v469, %v492
        %v508 = vmul.f32 %v469, %v496
        %v509 = vmul.f32 %v473, %v492
        %v510 = vmul.f32 %v473, %v496
        %v511 = vmul.f32 %v477, %v492
        %v512 = vmul.f32 %v477, %v496
        %v513 = vadd.f32 %v431, %v497
        %v514 = vadd.f32 %v432, %v498
        %v515 = vadd.f32 %v433, %v499
        %v516 = vadd.f32 %v434, %v500
        %v517 = vadd.f32 %v435, %v501
        %v518 = vadd.f32 %v436, %v502
        %v519 = vadd.f32 %v437, %v503
        %v520 = vadd.f32 %v438, %v504
        %v521 = vadd.f32 %v439, %v505
        %v522 = vadd.f32 %v440, %v506
        %v523 = vadd.f32 %v441, %v507
        %v524 = vadd.f32 %v442, %v508
        %v525 = vadd.f32 %v443, %v509
        %v526 = vadd.f32 %v444, %v510
        %v527 = vadd.f32 %v445, %v511
        %v528 = vadd.f32 %v446, %v512
        %v529 = vld [vmem:[%s2] sm:$0xff]
        %v530 = vld [vmem:[%s2 + $0x8] sm:$0xff]
        %v531 = vld [vmem:[%s2 + $0x10] sm:$0xff]
        %v532 = vld [vmem:[%s2 + $0x18] sm:$0xff]
        %v533 = vld [vmem:[%s2 + $0x20] sm:$0xff]
        %v534 = vld [vmem:[%s2 + $0x28] sm:$0xff]
        %v535 = vld [vmem:[%s2 + $0x30] sm:$0xff]
        %v536 = vld [vmem:[%s2 + $0x38] sm:$0xff]
        %538 = vset.pattern.permute.xlu0 0
        %539 = vperm.xlu0 %538, %v529
        %v540 = vpop.permute.xlu0 %539
        %543 = vset.pattern.permute.xlu0 0
        %544 = vperm.xlu0 %543, %v530
        %v545 = vpop.permute.xlu0 %544
        %548 = vset.pattern.permute.xlu0 0
        %549 = vperm.xlu0 %548, %v531
        %v550 = vpop.permute.xlu0 %549
        %553 = vset.pattern.permute.xlu0 0
        %554 = vperm.xlu0 %553, %v532
        %v555 = vpop.permute.xlu0 %554
        %558 = vset.pattern.permute.xlu0 0
        %559 = vperm.xlu0 %558, %v533
        %v560 = vpop.permute.xlu0 %559
        %563 = vset.pattern.permute.xlu0 0
        %564 = vperm.xlu0 %563, %v534
        %v565 = vpop.permute.xlu0 %564
        %568 = vset.pattern.permute.xlu0 0
        %569 = vperm.xlu0 %568, %v535
        %v570 = vpop.permute.xlu0 %569
        %573 = vset.pattern.permute.xlu0 0
        %574 = vperm.xlu0 %573, %v536
        %v575 = vpop.permute.xlu0 %574
        %v577 = vadd.f32 %v513, %v540
        %v578 = vadd.f32 %v514, %v540
        %v579 = vadd.f32 %v515, %v545
        %v580 = vadd.f32 %v516, %v545
        %v581 = vadd.f32 %v517, %v550
        %v582 = vadd.f32 %v518, %v550
        %v583 = vadd.f32 %v519, %v555
        %v584 = vadd.f32 %v520, %v555
        %v585 = vadd.f32 %v521, %v560
        %v586 = vadd.f32 %v522, %v560
        %v587 = vadd.f32 %v523, %v565
        %v588 = vadd.f32 %v524, %v565
        %v589 = vadd.f32 %v525, %v570
        %v590 = vadd.f32 %v526, %v570
        %v591 = vadd.f32 %v527, %v575
        %v592 = vadd.f32 %v528, %v575
        %v593 = vmax.f32 %v577, 0.0
        %v594 = vmax.f32 %v578, 0.0
        %v595 = vmax.f32 %v579, 0.0
        %v596 = vmax.f32 %v580, 0.0
        %v597 = vmax.f32 %v581, 0.0
        %v598 = vmax.f32 %v582, 0.0
        %v599 = vmax.f32 %v583, 0.0
        %v600 = vmax.f32 %v584, 0.0
        %v601 = vmax.f32 %v585, 0.0
        %v602 = vmax.f32 %v586, 0.0
        %v603 = vmax.f32 %v587, 0.0
        %v604 = vmax.f32 %v588, 0.0
        %v605 = vmax.f32 %v589, 0.0
        %v606 = vmax.f32 %v590, 0.0
        %v607 = vmax.f32 %v591, 0.0
        %v608 = vmax.f32 %v592, 0.0
        %v609 = vld [vmem:[%s3] sm:$0xf]
        %v610 = vld [vmem:[%s3 + $0x4] sm:$0xf]
        %v611 = vld [vmem:[%s3 + $0x8] sm:$0xf]
        %v612 = vld [vmem:[%s3 + $0xc] sm:$0xf]
        %v613 = vpack.c.bf16 %v595, %v593
        %v614 = vpack.c.bf16 %v596, %v594
        %v615 = vpack.c.bf16 %v599, %v597
        %v616 = vpack.c.bf16 %v600, %v598
        %v617 = vpack.c.bf16 %v603, %v601
        %v618 = vpack.c.bf16 %v604, %v602
        %v619 = vpack.c.bf16 %v607, %v605
        %v620 = vpack.c.bf16 %v608, %v606
        %v621 = vld [vmem:[%s4] sm:$0xff]
        %v622 = vld [vmem:[%s4 + $0x8] sm:$0xff]
        %v623 = vld [vmem:[%s4 + $0x10] sm:$0xff]
        %v624 = vld [vmem:[%s4 + $0x18] sm:$0xff]
        %626 = vset.pattern.permute.xlu0 0
        %627 = vperm.xlu0 %626, %v621
        %v628 = vpop.permute.xlu0 %627
        %631 = vset.pattern.permute.xlu0 0
        %632 = vperm.xlu0 %631, %v622
        %v633 = vpop.permute.xlu0 %632
        %636 = vset.pattern.permute.xlu0 0
        %637 = vperm.xlu0 %636, %v623
        %v638 = vpop.permute.xlu0 %637
        %641 = vset.pattern.permute.xlu0 0
        %642 = vperm.xlu0 %641, %v624
        %v643 = vpop.permute.xlu0 %642
        %v649 = vunpack.c.l.b16 %v609
        %v650 = vunpack.c.l.b16 %v610
        %v651 = vunpack.c.l.b16 %v611
        %v652 = vunpack.c.l.b16 %v612
        %v653 = vpack.c.b16 %v650, %v649
        %v654 = vpack.c.b16 %v652, %v651
        %vm655 = vcmask 523264
        %v657 = vsel %vm655, %v653, 0
        %v660 = vsel %vm655, %v654, 0
        %662 = vmatprep.subr.bf16.mxu0 0
        %663 = vmatpush1.bf16.msra.mxu0 0
        %664 = vmatprep.subr.bf16.mxu0 0
        %665 = vmatpush1.bf16.msra.mxu0 0
        %666 = vmatprep.subr.bf16.mxu0 0
        %667 = vmatpush1.bf16.msra.mxu0 0
        %668 = vmatprep.subr.bf16.mxu0 0
        %669 = vmatpush1.bf16.msra.mxu0 0
        %670 = vmatprep.subr.bf16.mxu0 %v620
        %671 = vmatpush1.bf16.msra.mxu0 %v619
        %672 = vmatprep.subr.bf16.mxu0 %v618
        %673 = vmatpush1.bf16.msra.mxu0 %v617
        %674 = vmatprep.subr.bf16.mxu0 %v616
        %675 = vmatpush1.bf16.msra.mxu0 %v615
        %676 = vmatprep.subr.bf16.mxu0 %v614
        %677 = vmatpush1.bf16.msra.mxu0 %v613
        %678 = vmatprep.subr.bf16.mxu0 0
        %679 = vmatpush2.bf16.msra.mxu0 0
        %680 = vmatprep.subr.bf16.mxu0 0
        %681 = vmatpush2.bf16.msra.mxu0 0
        %682 = vmatprep.subr.bf16.mxu0 0
        %683 = vmatpush2.bf16.msra.mxu0 0
        %684 = vmatprep.subr.bf16.mxu0 0
        %685 = vmatpush2.bf16.msra.mxu0 0
        %686 = vmatprep.subr.bf16.mxu0 0
        %687 = vmatpush2.bf16.msra.mxu0 0
        %688 = vmatprep.subr.bf16.mxu0 0
        %689 = vmatpush2.bf16.msra.mxu0 0
        %690 = vmatprep.subr.bf16.mxu0 0
        %691 = vmatpush2.bf16.msra.mxu0 0
        %692 = vmatprep.subr.bf16.mxu0 0
        %693 = vmatpush2.bf16.msra.mxu0 0
        %694 = vmatprep.mubr.bf16.mxu0 0
        %695 = vmatmul.mubr.bf16.gmra.mxu0 %v657
        %v696 = vpop.f32.mrf.mxu0
        %v697 = vadd.f32 %v628, %v696
        %v698 = vpop.f32.mrf.mxu0
        %v699 = vadd.f32 %v628, %v698
        %v700 = vpop.f32.mrf.mxu0
        %v701 = vadd.f32 %v633, %v700
        %v702 = vpop.f32.mrf.mxu0
        %v703 = vadd.f32 %v633, %v702
        %704 = vmatprep.mubr.bf16.mxu0 0
        %705 = vmatmul.mubr.bf16.gmra.mxu0 %v660
        %v706 = vpop.f32.mrf.mxu0
        %v707 = vadd.f32 %v638, %v706
        %v708 = vpop.f32.mrf.mxu0
        %v709 = vadd.f32 %v638, %v708
        %v710 = vpop.f32.mrf.mxu0
        %v711 = vadd.f32 %v643, %v710
        %v712 = vpop.f32.mrf.mxu0
        %v713 = vadd.f32 %v643, %v712
        %714 = vdwg.mxu0
        %v715 = vmax.f32 %v697, 0.0
        %v716 = vmax.f32 %v699, 0.0
        %v717 = vmax.f32 %v701, 0.0
        %v718 = vmax.f32 %v703, 0.0
        %v719 = vmax.f32 %v707, 0.0
        %v720 = vmax.f32 %v709, 0.0
        %v721 = vmax.f32 %v711, 0.0
        %v722 = vmax.f32 %v713, 0.0
        %v723 = vld [vmem:[%s5] sm:$0xf]
        %v724 = vpack.c.bf16 %v717, %v715
        %v725 = vpack.c.bf16 %v718, %v716
        %v726 = vpack.c.bf16 %v721, %v719
        %v727 = vpack.c.bf16 %v722, %v720
        %v728 = vld [vmem:[%s6] sm:$0xff]
        %730 = vset.pattern.permute.xlu0 0
        %731 = vperm.xlu0 %730, %v728
        %v732 = vpop.permute.xlu0 %731
        %vm734 = vcmask 261120
        %v736 = vsel %vm734, %v723, 0
        %738 = vmatprep.subr.bf16.mxu0 0
        %739 = vmatpush1.bf16.msra.mxu0 0
        %740 = vmatprep.subr.bf16.mxu0 0
        %741 = vmatpush1.bf16.msra.mxu0 0
        %742 = vmatprep.subr.bf16.mxu0 0
        %743 = vmatpush1.bf16.msra.mxu0 0
        %744 = vmatprep.subr.bf16.mxu0 0
        %745 = vmatpush1.bf16.msra.mxu0 0
        %746 = vmatprep.subr.bf16.mxu0 0
        %747 = vmatpush1.bf16.msra.mxu0 0
        %748 = vmatprep.subr.bf16.mxu0 0
        %749 = vmatpush1.bf16.msra.mxu0 0
        %750 = vmatprep.subr.bf16.mxu0 %v727
        %751 = vmatpush1.bf16.msra.mxu0 %v726
        %752 = vmatprep.subr.bf16.mxu0 %v725
        %753 = vmatpush1.bf16.msra.mxu0 %v724
        %754 = vmatprep.subr.bf16.mxu0 0
        %755 = vmatpush2.bf16.msra.mxu0 0
        %756 = vmatprep.subr.bf16.mxu0 0
        %757 = vmatpush2.bf16.msra.mxu0 0
        %758 = vmatprep.subr.bf16.mxu0 0
        %759 = vmatpush2.bf16.msra.mxu0 0
        %760 = vmatprep.subr.bf16.mxu0 0
        %761 = vmatpush2.bf16.msra.mxu0 0
        %762 = vmatprep.subr.bf16.mxu0 0
        %763 = vmatpush2.bf16.msra.mxu0 0
        %764 = vmatprep.subr.bf16.mxu0 0
        %765 = vmatpush2.bf16.msra.mxu0 0
        %766 = vmatprep.subr.bf16.mxu0 0
        %767 = vmatpush2.bf16.msra.mxu0 0
        %768 = vmatprep.subr.bf16.mxu0 0
        %769 = vmatpush2.bf16.msra.mxu0 0
        %770 = vmatprep.mubr.bf16.mxu0 0
        %771 = vmatmul.mubr.bf16.gmra.mxu0 %v736
        %v772 = vpop.f32.mrf.mxu0
        %v773 = vadd.f32 %v732, %v772
        %v774 = vpop.f32.mrf.mxu0
        %v775 = vadd.f32 %v732, %v774
        %v776 = vpop.f32.mrf.mxu0
        %v777 = vpop.f32.mrf.mxu0
        %778 = vdwg.mxu0
        %779 = vst [vmem:[%s272] sm:$0xff] %v773
        %780 = vst [vmem:[%s272 + $0x8] sm:$0xff] %v775
        %s781 = sand.u32 %s181, 1
        %s782 = scalar_lea.sflag [#allocation3], %s781
        %s783 = sand.u32 %s181, 1
        %s784 = smul.addr %s783, 16
        %s785 = scalar_lea.vmem [#allocation2], %s784
        // Predicated region
        $region49: #{tpu_custom_call.1} parent=47 // pred_check
          %p786 = pneg %p191
        $region50: #{tpu_custom_call.1} parent=47 // pred_check_branch
          %788 = sbr.rel (%p786) target = $region52
        $region51: #{tpu_custom_call.1} parent=47 // pred_region
          %s789 = smul.u32 2, %s21
          %s791 = ssub.s32 256, 256
          %792 = vsyncadd %s782, %s791
          %s793 = smul.addr %s789, 128
          %s794 = scalar_lea.hbm %s7, %s793
          %s796 = sshll.u32 %s785, 4
          %s797 = int_to_ptr.vmem [resolvable:$true] %s796
          %799 = dma.vmem_to_hbm [thread:$0]  %s797, 256, %s794, %s782
        $region52: #{tpu_custom_call.1} parent=47 // pred_fallthru
          _
      $region48: #{tpu_custom_call.1} parent=5 // pred_fallthru
        _
      %p800 = scmp.le.s32.totalorder 2, %s16
      // Predicated region
      $region53: #{tpu_custom_call.1} parent=5 // pred_check
        %p801 = pneg %p800
      $region54: #{tpu_custom_call.1} parent=5 // pred_check_branch
        %803 = sbr.rel (%p801) target = $region56
      $region55: #{tpu_custom_call.1} parent=5 // pred_region
        %s804 = ssub.s32 %s16, 2
        // Predicated region
        $region57: #{tpu_custom_call.1} parent=55 // pred_check
          %p805 = pneg %p197
        $region58: #{tpu_custom_call.1} parent=55 // pred_check_branch
          %807 = sbr.rel (%p805) target = $region60
        $region59: #{tpu_custom_call.1} parent=55 // pred_region
          %s808 = sand.u32 %s182, 1
          %s809 = scalar_lea.sflag [#allocation3], %s808
          %s810 = sand.u32 %s182, 1
          %s811 = smul.addr %s810, 16
          %s812 = scalar_lea.vmem [#allocation2], %s811
          %813 = dma.done %s809, 256
        $region60: #{tpu_custom_call.1} parent=55 // pred_fallthru
          _
      $region56: #{tpu_custom_call.1} parent=5 // pred_fallthru
        _
    $region6: #{tpu_custom_call.1} parent=1 // loop_footer
      %s20 = sadd.s32 1, %s16
    $region7: #{tpu_custom_call.1} parent=1 // loop_footer_branch
      %15 = sbr.rel target = $region3
    $region8: #{tpu_custom_call.1} parent=1 // loop_exit
      _
    %814 = vsyncpa [#allocation3], 1
    %s815 = scalar_lea.sflag [#allocation3], 1
    %816 = vsyncpa %s815, 1

</llo_original>
